<compile_context>
chip_gen: v7x
topology: tpu7x:2x2x1
jax: 0.10.0
libtpu: 0.0.40
codegen_flags: <defaults>
</compile_context>

<pallas_src>
import functools

import jax
import jax.numpy as jnp
from jax.experimental import pallas as pl
from jax.experimental.pallas import tpu as pltpu


def _round_up(x, m):
    return ((x + m - 1) // m) * m


def _extraction_kernel(*refs, relu_flags):
    """Fused chain of SharedFCBlocks on one (tm, Cin) row tile.

    refs = (x_ref, w0_ref, shift0_ref, w1_ref, shift1_ref, ..., o_ref).
    Each block: y = y @ W' + shift  (scale pre-folded into W'), optional ReLU.
    Intermediates stay in vregs/VMEM; only the final tile is stored.
    """
    n_blocks = len(relu_flags)
    x_ref = refs[0]
    o_ref = refs[1 + 2 * n_blocks]

    y = x_ref[...].astype(jnp.float32)
    for b in range(n_blocks):
        w_ref = refs[1 + 2 * b]
        shift_ref = refs[2 + 2 * b]
        y = jnp.dot(y, w_ref[...], preferred_element_type=jnp.float32)
        y = y + shift_ref[...]
        if relu_flags[b]:
            y = jnp.maximum(y, 0.0)
    o_ref[...] = y.astype(o_ref.dtype)


def extraction_forward(x, params, *, tm_max=512):
    """Extraction.forward as ONE fused Pallas kernel.

    x: (B, N, Cin). params: list of dicts with 'w_folded' (Cin_l, Cout_l),
    'shift' (Cout_l,), 'use_relu'. Assumes the per-block channel dims fit in
    VMEM (true for typical shared-MLP / PointNet-style configs)."""
    B, N, Cin = x.shape
    M = B * N
    Cout = params[-1]["w_folded"].shape[1]

    # Row tile: (8-aligned), >= 2 grid steps when possible so v7x's two
    # TensorCores both get work; clamp to tm_max for VMEM.
    mp8 = _round_up(M, 8)
    tm = min(tm_max, max(8, _round_up(pl.cdiv(mp8, 2), 8)))
    m_pad = _round_up(M, tm)

    x2 = x.reshape(M, Cin)
    if m_pad != M:
        x2 = jnp.pad(x2, ((0, m_pad - M), (0, 0)))

    grid = (m_pad // tm,)

    # Activations stream per row tile; weights/shifts use a constant block
    # index so they are fetched once and stay VMEM-resident across the grid.
    in_specs = [pl.BlockSpec((tm, Cin), lambda i: (i, 0))]
    args = [x2]
    for p in params:
        ci, co = p["w_folded"].shape
        in_specs.append(pl.BlockSpec((ci, co), lambda i: (0, 0)))
        in_specs.append(pl.BlockSpec((1, co), lambda i: (0, 0)))
        args.append(p["w_folded"].astype(jnp.float32))
        args.append(p["shift"].reshape(1, co).astype(jnp.float32))

    relu_flags = tuple(bool(p["use_relu"]) for p in params)

    out = pl.pallas_call(
        functools.partial(_extraction_kernel, relu_flags=relu_flags),
        out_shape=jax.ShapeDtypeStruct((m_pad, Cout), x.dtype),
        grid_spec=pltpu.PrefetchScalarGridSpec(
            num_scalar_prefetch=0,
            grid=grid,
            in_specs=in_specs,
            out_specs=pl.BlockSpec((tm, Cout), lambda i: (i, 0)),
        ),
        compiler_params=pltpu.CompilerParams(
            dimension_semantics=("parallel",),
            vmem_limit_bytes=32 << 20,
        ),
    )(*args)

    if m_pad != M:
        out = out[:M]
    return out.reshape(B, N, Cout)


def make_extraction_params(key, blocks):
    """Deterministic parameters for each SharedFCBlock config.

    Conv bias exists only when normalize=False (bias=not normalize), matching
    the PyTorch module.  BatchNorm is folded (inference mode) into
    scale = gamma / sqrt(var + eps), shift = beta - mean * scale.
    The scale is additionally pre-folded into the weight columns
    (w_folded = w * scale) so the kernel epilogue is a single add."""
    params = []
    for cfg in blocks:
        cin, cout = cfg["in_features"], cfg["out_features"]
        key, kw, kb, kg, kbt, km, kv = jax.random.split(key, 7)
        w = jax.random.normal(kw, (cin, cout), jnp.float32) / jnp.sqrt(cin)
        if cfg["normalize"]:
            gamma = 1.0 + 0.1 * jax.random.normal(kg, (cout,), jnp.float32)
            beta = 0.1 * jax.random.normal(kbt, (cout,), jnp.float32)
            mean = 0.1 * jax.random.normal(km, (cout,), jnp.float32)
            var = jnp.abs(jax.random.normal(kv, (cout,), jnp.float32)) + 0.5
            eps = 1e-5
            scale = gamma * jax.lax.rsqrt(var + eps)
            shift = beta - mean * scale
        else:
            bias = 0.1 * jax.random.normal(kb, (cout,), jnp.float32)
            scale = jnp.ones((cout,), jnp.float32)
            shift = bias
        params.append(dict(
            w=w, scale=scale, shift=shift,
            w_folded=w * scale[None, :],
            use_relu=(cfg["activation"] == "relu")))
    return params


def extraction_reference(x, params):
    """Plain-JAX reference following the PyTorch op order:
    conv (x@W [+bias]) -> BN affine -> activation."""
    y = x
    for p in params:
        y = jnp.einsum("bnc,cd->bnd", y, p["w"],
                       precision=jax.lax.Precision.HIGHEST)
        y = y * p["scale"] + p["shift"]
        if p["use_relu"]:
            y = jnp.maximum(y, 0.0)
    return y


if __name__ == "__main__":
    key = jax.random.PRNGKey(0)
    B, N, C = 2, 8, 32  # batch=2, points=8, hidden=32

    blocks = [
        dict(in_features=32, out_features=64, normalize=True, activation="relu"),
        dict(in_features=64, out_features=64, normalize=True, activation="relu"),
        dict(in_features=64, out_features=32, normalize=False, activation=None),
    ]

    kx, kp = jax.random.split(key)
    x = jax.random.normal(kx, (B, N, C), dtype=jnp.float32)
    params = make_extraction_params(kp, blocks)

    y = extraction_forward(x, params)
    jax.block_until_ready(y)

    y_ref = extraction_reference(x, params)
    assert y.shape == (B, N, 32), y.shape
    assert jnp.allclose(y, y_ref, atol=1e-3, rtol=1e-3), float(
        jnp.max(jnp.abs(y - y_ref)))

    print("KERNEL_OK")
</pallas_src>

<mosaic_0001>
module attributes {stable_mosaic.version = 11 : i64} {
  func.func @_extraction_kernel(%arg0: i32, %arg1: memref<8x32xf32, #tpu.memory_space<vmem>>, %arg2: memref<32x64xf32, #tpu.memory_space<vmem>>, %arg3: memref<1x64xf32, #tpu.memory_space<vmem>>, %arg4: memref<64x64xf32, #tpu.memory_space<vmem>>, %arg5: memref<1x64xf32, #tpu.memory_space<vmem>>, %arg6: memref<64x32xf32, #tpu.memory_space<vmem>>, %arg7: memref<1x32xf32, #tpu.memory_space<vmem>>, %arg8: memref<8x32xf32, #tpu.memory_space<vmem>>) attributes {dimension_semantics = [#tpu.dimension_semantics<parallel>], iteration_bounds = array<i64: 2>, scalar_prefetch = 0 : i64, scratch_operands = 0 : i64, tpu.core_type = #tpu.core_type<tc>, window_params = [{transform_indices = @transform_0, window_bounds = array<i64: 8, 32>}, {pipeline_mode = #tpu.pipeline_mode<synchronous>, transform_indices = @transform_1, window_bounds = array<i64: 32, 64>}, {pipeline_mode = #tpu.pipeline_mode<synchronous>, transform_indices = @transform_2, window_bounds = array<i64: 1, 64>}, {pipeline_mode = #tpu.pipeline_mode<synchronous>, transform_indices = @transform_3, window_bounds = array<i64: 64, 64>}, {pipeline_mode = #tpu.pipeline_mode<synchronous>, transform_indices = @transform_4, window_bounds = array<i64: 1, 64>}, {pipeline_mode = #tpu.pipeline_mode<synchronous>, transform_indices = @transform_5, window_bounds = array<i64: 64, 32>}, {pipeline_mode = #tpu.pipeline_mode<synchronous>, transform_indices = @transform_6, window_bounds = array<i64: 1, 32>}, {transform_indices = @transform_7, window_bounds = array<i64: 8, 32>}]} {
    %c0 = arith.constant 0 : index
    %c0_0 = arith.constant 0 : index
    %0 = vector.load %arg1[%c0, %c0_0] : memref<8x32xf32, #tpu.memory_space<vmem>>, vector<8x32xf32>
    %c0_1 = arith.constant 0 : index
    %c0_2 = arith.constant 0 : index
    %1 = vector.load %arg2[%c0_1, %c0_2] : memref<32x64xf32, #tpu.memory_space<vmem>>, vector<32x64xf32>
    %cst = arith.constant dense<0.000000e+00> : vector<8x64xf32>
    %2 = tpu.matmul %0, %1, %cst {dimension_numbers = #tpu.dot_dimension_numbers<[1], [0], [0], [1], [0, 0, 1, 1], [], []>} : vector<8x32xf32>, vector<32x64xf32>, vector<8x64xf32> -> vector<8x64xf32>
    %c0_3 = arith.constant 0 : index
    %c0_4 = arith.constant 0 : index
    %3 = vector.load %arg3[%c0_3, %c0_4] : memref<1x64xf32, #tpu.memory_space<vmem>>, vector<1x64xf32>
    %4 = vector.broadcast %3 : vector<1x64xf32> to vector<8x64xf32>
    %5 = arith.addf %2, %4 : vector<8x64xf32>
    %cst_5 = arith.constant 0.000000e+00 : f32
    %6 = vector.broadcast %cst_5 : f32 to vector<8x64xf32>
    %7 = arith.maximumf %5, %6 : vector<8x64xf32>
    %c0_6 = arith.constant 0 : index
    %c0_7 = arith.constant 0 : index
    %8 = vector.load %arg4[%c0_6, %c0_7] : memref<64x64xf32, #tpu.memory_space<vmem>>, vector<64x64xf32>
    %cst_8 = arith.constant dense<0.000000e+00> : vector<8x64xf32>
    %9 = tpu.matmul %7, %8, %cst_8 {dimension_numbers = #tpu.dot_dimension_numbers<[1], [0], [0], [1], [0, 0, 1, 1], [], []>} : vector<8x64xf32>, vector<64x64xf32>, vector<8x64xf32> -> vector<8x64xf32>
    %c0_9 = arith.constant 0 : index
    %c0_10 = arith.constant 0 : index
    %10 = vector.load %arg5[%c0_9, %c0_10] : memref<1x64xf32, #tpu.memory_space<vmem>>, vector<1x64xf32>
    %11 = vector.broadcast %10 : vector<1x64xf32> to vector<8x64xf32>
    %12 = arith.addf %9, %11 : vector<8x64xf32>
    %cst_11 = arith.constant 0.000000e+00 : f32
    %13 = vector.broadcast %cst_11 : f32 to vector<8x64xf32>
    %14 = arith.maximumf %12, %13 : vector<8x64xf32>
    %c0_12 = arith.constant 0 : index
    %c0_13 = arith.constant 0 : index
    %15 = vector.load %arg6[%c0_12, %c0_13] : memref<64x32xf32, #tpu.memory_space<vmem>>, vector<64x32xf32>
    %cst_14 = arith.constant dense<0.000000e+00> : vector<8x32xf32>
    %16 = tpu.matmul %14, %15, %cst_14 {dimension_numbers = #tpu.dot_dimension_numbers<[1], [0], [0], [1], [0, 0, 1, 1], [], []>} : vector<8x64xf32>, vector<64x32xf32>, vector<8x32xf32> -> vector<8x32xf32>
    %c0_15 = arith.constant 0 : index
    %c0_16 = arith.constant 0 : index
    %17 = vector.load %arg7[%c0_15, %c0_16] : memref<1x32xf32, #tpu.memory_space<vmem>>, vector<1x32xf32>
    %18 = vector.broadcast %17 : vector<1x32xf32> to vector<8x32xf32>
    %19 = arith.addf %16, %18 : vector<8x32xf32>
    %c0_17 = arith.constant 0 : index
    %c0_18 = arith.constant 0 : index
    %20 = vector.load %arg8[%c0_17, %c0_18] : memref<8x32xf32, #tpu.memory_space<vmem>>, vector<8x32xf32>
    tpu.vector_store %arg8[%c0_17, %c0_18], %19 {strides = array<i32>} : memref<8x32xf32, #tpu.memory_space<vmem>>, vector<8x32xf32>,
    return
  }
  func.func @transform_0(%arg0: i32) -> (i32, i32) {
    %c0_i32 = arith.constant 0 : i32
    %c0_i32_0 = arith.constant 0 : i32
    return %arg0, %c0_i32 : i32, i32
  }
  func.func @transform_1(%arg0: i32) -> (i32, i32) {
    %c0_i32 = arith.constant 0 : i32
    %c0_i32_0 = arith.constant 0 : i32
    %c0_i32_1 = arith.constant 0 : i32
    return %c0_i32, %c0_i32_0 : i32, i32
  }
  func.func @transform_2(%arg0: i32) -> (i32, i32) {
    %c0_i32 = arith.constant 0 : i32
    %c0_i32_0 = arith.constant 0 : i32
    %c0_i32_1 = arith.constant 0 : i32
    return %c0_i32, %c0_i32_0 : i32, i32
  }
  func.func @transform_3(%arg0: i32) -> (i32, i32) {
    %c0_i32 = arith.constant 0 : i32
    %c0_i32_0 = arith.constant 0 : i32
    %c0_i32_1 = arith.constant 0 : i32
    return %c0_i32, %c0_i32_0 : i32, i32
  }
  func.func @transform_4(%arg0: i32) -> (i32, i32) {
    %c0_i32 = arith.constant 0 : i32
    %c0_i32_0 = arith.constant 0 : i32
    %c0_i32_1 = arith.constant 0 : i32
    return %c0_i32, %c0_i32_0 : i32, i32
  }
  func.func @transform_5(%arg0: i32) -> (i32, i32) {
    %c0_i32 = arith.constant 0 : i32
    %c0_i32_0 = arith.constant 0 : i32
    %c0_i32_1 = arith.constant 0 : i32
    return %c0_i32, %c0_i32_0 : i32, i32
  }
  func.func @transform_6(%arg0: i32) -> (i32, i32) {
    %c0_i32 = arith.constant 0 : i32
    %c0_i32_0 = arith.constant 0 : i32
    %c0_i32_1 = arith.constant 0 : i32
    return %c0_i32, %c0_i32_0 : i32, i32
  }
  func.func @transform_7(%arg0: i32) -> (i32, i32) {
    %c0_i32 = arith.constant 0 : i32
    %c0_i32_0 = arith.constant 0 : i32
    return %arg0, %c0_i32 : i32, i32
  }
}

</mosaic_0001>

<llo_original>
// kernel: tpu_custom_call.1
$region0: #{tpu_custom_call.1}
  #allocation0 [shape = 'u32[]', space=smem, size = 0x4, offset = 0x4, fixed_abs, tag = 'smem constant byte address 0x4 - core index']
  #allocation1 [shape = 'u32[144,128]{1,0:T(1,128)}', space=vmem, size = 0x12000, scoped, tag = 'internal scratch']
  %s0 = inlined_call_operand.hbm [shape: f32[16,32], index: 0, kind: input, shape index: {}]
  %s1 = inlined_call_operand.vmem [shape: f32[32,64], index: 1, kind: input, shape index: {}]
  %s2 = inlined_call_operand.vmem [shape: f32[1,64], index: 2, kind: input, shape index: {}]
  %s3 = inlined_call_operand.vmem [shape: f32[64,64], index: 3, kind: input, shape index: {}]
  %s4 = inlined_call_operand.vmem [shape: f32[1,64], index: 4, kind: input, shape index: {}]
  %s5 = inlined_call_operand.vmem [shape: f32[64,32], index: 5, kind: input, shape index: {}]
  %s6 = inlined_call_operand.vmem [shape: f32[1,32], index: 6, kind: input, shape index: {}]
  %s7 = inlined_call_operand.hbm [shape: f32[16,32], index: 7, kind: output, shape index: {}]
  %s8 = sld [smem:[#allocation0]]
  $region65: #{tpu_custom_call.1} parent=0
    _
  %s10 = ssub.s32 1, %s8
  %s11 = scalar_select 0, %s10, %s8
  $region1: #{tpu_custom_call.1} parent=0
    #allocation2 [shape = 'u8[8192]{0}', space=vmem, size = 0x2000, scoped, tag = 'input window, operand 0']
    #allocation3 [shape = 's32[2]{0}', space=sflag, size = 0x8, scoped, tag = 'scoped memory for tpu_custom_call.1']
    #allocation4 [shape = 's32[2]{0}', space=sflag, size = 0x8, scoped, tag = 'scoped memory for tpu_custom_call.1']
    #allocation5 [shape = 'u8[8192]{0}', space=vmem, size = 0x2000, scoped, tag = 'output window, operand 0']
    %12 = vsyncpa [#allocation3], 0
    %s13 = scalar_lea.sflag [#allocation3], 1
    %14 = vsyncpa %s13, 0
    %15 = vsyncpa [#allocation4], 0
    %s16 = scalar_lea.sflag [#allocation4], 1
    %17 = vsyncpa %s16, 0
    loop: start=0, step=1, limit=4
    $region2: #{tpu_custom_call.1} parent=1 // loop_pre_header
      _
    $region3: #{tpu_custom_call.1} parent=1 // loop_header
      %s19 = sphi 0, %s23
      %p20 = scmp.ge.s32.totalorder %s19, 4
      %s29 = sphi 0, %s31
      %s32 = sphi 0, %s29
      %s33 = sphi 0, %s32
      %s49 = sphi 0, %s33
      %s53 = sphi 0, %s53
      %s55 = sphi 0, %s53
      %s56 = sphi 0, %s55
      %s70 = sphi 0, %s56
      %s74 = sphi 0, %s74
      %s76 = sphi 0, %s74
      %s77 = sphi 0, %s76
      %s91 = sphi 0, %s77
      %s95 = sphi 0, %s95
      %s97 = sphi 0, %s95
      %s98 = sphi 0, %s97
      %s112 = sphi 0, %s98
      %s116 = sphi 0, %s116
      %s118 = sphi 0, %s116
      %s119 = sphi 0, %s118
      %s133 = sphi 0, %s119
      %s137 = sphi 0, %s137
      %s139 = sphi 0, %s137
      %s140 = sphi 0, %s139
      %s154 = sphi 0, %s140
      %s158 = sphi 0, %s158
      %s160 = sphi 0, %s158
      %s161 = sphi 0, %s160
      %s175 = sphi 0, %s161
      %s181 = sphi 0, %s183
      %s184 = sphi 0, %s181
      %s185 = sphi 0, %s184
      %s201 = sphi 0, %s185
    $region4: #{tpu_custom_call.1} parent=1 // loop_header_branch
      %22 = sbr.rel (%p20) target = $region8
    $region5: #{tpu_custom_call.1} parent=1 // loop_body
      %s24 = ssub.s32 %s19, 1
      %s25 = ssub.s32 %s19, 2
      %s26 = sadd.s32 %s19, 1
      %s27 = ssub.s32 %s19, %s26
      %p28 = scmp.eq.s32.totalorder %s27, 0
      %s30 = sadd.s32 %s29, 1
      %s31 = scalar_select %p28, %s29, %s30
      %p34 = pneg %p28
      %p35 = scmp.eq.s32.totalorder %s19, 1
      %p36 = por %p34, %p35
      %p37 = scmp.ne.s32.totalorder %s29, %s32
      %p38 = scmp.eq.s32.totalorder %s19, 0
      %p39 = por %p37, %p38
      %p40 = scmp.ne.s32.totalorder %s29, %s32
      %p41 = scmp.eq.s32.totalorder %s24, 1
      %p42 = por %p40, %p41
      %p43 = scmp.ne.s32.totalorder %s32, %s33
      %p44 = scmp.eq.s32.totalorder %s24, 0
      %p45 = por %p43, %p44
      %p46 = scmp.ne.s32.totalorder %s32, %s33
      %p47 = scmp.eq.s32.totalorder %s25, 1
      %p48 = por %p46, %p47
      %p50 = scmp.ne.s32.totalorder %s33, %s49
      %p51 = scmp.eq.s32.totalorder %s25, 0
      %p52 = por %p50, %p51
      %s54 = sadd.s32 %s53, 1
      %p57 = scmp.eq.s32.totalorder %s19, 1
      %p58 = scmp.ne.s32.totalorder %s53, %s55
      %p59 = scmp.eq.s32.totalorder %s19, 0
      %p60 = por %p58, %p59
      %p61 = scmp.ne.s32.totalorder %s53, %s55
      %p62 = scmp.eq.s32.totalorder %s24, 1
      %p63 = por %p61, %p62
      %p64 = scmp.ne.s32.totalorder %s55, %s56
      %p65 = scmp.eq.s32.totalorder %s24, 0
      %p66 = por %p64, %p65
      %p67 = scmp.ne.s32.totalorder %s55, %s56
      %p68 = scmp.eq.s32.totalorder %s25, 1
      %p69 = por %p67, %p68
      %p71 = scmp.ne.s32.totalorder %s56, %s70
      %p72 = scmp.eq.s32.totalorder %s25, 0
      %p73 = por %p71, %p72
      %s75 = sadd.s32 %s74, 1
      %p78 = scmp.eq.s32.totalorder %s19, 1
      %p79 = scmp.ne.s32.totalorder %s74, %s76
      %p80 = scmp.eq.s32.totalorder %s19, 0
      %p81 = por %p79, %p80
      %p82 = scmp.ne.s32.totalorder %s74, %s76
      %p83 = scmp.eq.s32.totalorder %s24, 1
      %p84 = por %p82, %p83
      %p85 = scmp.ne.s32.totalorder %s76, %s77
      %p86 = scmp.eq.s32.totalorder %s24, 0
      %p87 = por %p85, %p86
      %p88 = scmp.ne.s32.totalorder %s76, %s77
      %p89 = scmp.eq.s32.totalorder %s25, 1
      %p90 = por %p88, %p89
      %p92 = scmp.ne.s32.totalorder %s77, %s91
      %p93 = scmp.eq.s32.totalorder %s25, 0
      %p94 = por %p92, %p93
      %s96 = sadd.s32 %s95, 1
      %p99 = scmp.eq.s32.totalorder %s19, 1
      %p100 = scmp.ne.s32.totalorder %s95, %s97
      %p101 = scmp.eq.s32.totalorder %s19, 0
      %p102 = por %p100, %p101
      %p103 = scmp.ne.s32.totalorder %s95, %s97
      %p104 = scmp.eq.s32.totalorder %s24, 1
      %p105 = por %p103, %p104
      %p106 = scmp.ne.s32.totalorder %s97, %s98
      %p107 = scmp.eq.s32.totalorder %s24, 0
      %p108 = por %p106, %p107
      %p109 = scmp.ne.s32.totalorder %s97, %s98
      %p110 = scmp.eq.s32.totalorder %s25, 1
      %p111 = por %p109, %p110
      %p113 = scmp.ne.s32.totalorder %s98, %s112
      %p114 = scmp.eq.s32.totalorder %s25, 0
      %p115 = por %p113, %p114
      %s117 = sadd.s32 %s116, 1
      %p120 = scmp.eq.s32.totalorder %s19, 1
      %p121 = scmp.ne.s32.totalorder %s116, %s118
      %p122 = scmp.eq.s32.totalorder %s19, 0
      %p123 = por %p121, %p122
      %p124 = scmp.ne.s32.totalorder %s116, %s118
      %p125 = scmp.eq.s32.totalorder %s24, 1
      %p126 = por %p124, %p125
      %p127 = scmp.ne.s32.totalorder %s118, %s119
      %p128 = scmp.eq.s32.totalorder %s24, 0
      %p129 = por %p127, %p128
      %p130 = scmp.ne.s32.totalorder %s118, %s119
      %p131 = scmp.eq.s32.totalorder %s25, 1
      %p132 = por %p130, %p131
      %p134 = scmp.ne.s32.totalorder %s119, %s133
      %p135 = scmp.eq.s32.totalorder %s25, 0
      %p136 = por %p134, %p135
      %s138 = sadd.s32 %s137, 1
      %p141 = scmp.eq.s32.totalorder %s19, 1
      %p142 = scmp.ne.s32.totalorder %s137, %s139
      %p143 = scmp.eq.s32.totalorder %s19, 0
      %p144 = por %p142, %p143
      %p145 = scmp.ne.s32.totalorder %s137, %s139
      %p146 = scmp.eq.s32.totalorder %s24, 1
      %p147 = por %p145, %p146
      %p148 = scmp.ne.s32.totalorder %s139, %s140
      %p149 = scmp.eq.s32.totalorder %s24, 0
      %p150 = por %p148, %p149
      %p151 = scmp.ne.s32.totalorder %s139, %s140
      %p152 = scmp.eq.s32.totalorder %s25, 1
      %p153 = por %p151, %p152
      %p155 = scmp.ne.s32.totalorder %s140, %s154
      %p156 = scmp.eq.s32.totalorder %s25, 0
      %p157 = por %p155, %p156
      %s159 = sadd.s32 %s158, 1
      %p162 = scmp.eq.s32.totalorder %s19, 1
      %p163 = scmp.ne.s32.totalorder %s158, %s160
      %p164 = scmp.eq.s32.totalorder %s19, 0
      %p165 = por %p163, %p164
      %p166 = scmp.ne.s32.totalorder %s158, %s160
      %p167 = scmp.eq.s32.totalorder %s24, 1
      %p168 = por %p166, %p167
      %p169 = scmp.ne.s32.totalorder %s160, %s161
      %p170 = scmp.eq.s32.totalorder %s24, 0
      %p171 = por %p169, %p170
      %p172 = scmp.ne.s32.totalorder %s160, %s161
      %p173 = scmp.eq.s32.totalorder %s25, 1
      %p174 = por %p172, %p173
      %p176 = scmp.ne.s32.totalorder %s161, %s175
      %p177 = scmp.eq.s32.totalorder %s25, 0
      %p178 = por %p176, %p177
      %s179 = ssub.s32 %s19, %s26
      %p180 = scmp.eq.s32.totalorder %s179, 0
      %s182 = sadd.s32 %s181, 1
      %s183 = scalar_select %p180, %s181, %s182
      %p186 = pneg %p180
      %p187 = scmp.eq.s32.totalorder %s19, 1
      %p188 = por %p186, %p187
      %p189 = scmp.ne.s32.totalorder %s181, %s184
      %p190 = scmp.eq.s32.totalorder %s19, 0
      %p191 = por %p189, %p190
      %p192 = scmp.ne.s32.totalorder %s181, %s184
      %p193 = scmp.eq.s32.totalorder %s24, 1
      %p194 = por %p192, %p193
      %p195 = scmp.ne.s32.totalorder %s184, %s185
      %p196 = scmp.eq.s32.totalorder %s24, 0
      %p197 = por %p195, %p196
      %p198 = scmp.ne.s32.totalorder %s184, %s185
      %p199 = scmp.eq.s32.totalorder %s25, 1
      %p200 = por %p198, %p199
      %p202 = scmp.ne.s32.totalorder %s185, %s201
      %p203 = scmp.eq.s32.totalorder %s25, 0
      %p204 = por %p202, %p203
      %p205 = scmp.le.s32.totalorder 1, %s19
      %p206 = scmp.lt.s32.totalorder %s19, 3
      %p207 = pnand %p205, %p206
      %p208 = pneg %p207
      // Predicated region
      $region9: #{tpu_custom_call.1} parent=5 // pred_check
        _
      $region10: #{tpu_custom_call.1} parent=5 // pred_check_branch
        %210 = sbr.rel (%p207) target = $region12
      $region11: #{tpu_custom_call.1} parent=5 // pred_region
        %s211 = ssub.s32 %s19, 1
        // Predicated region
        $region13: #{tpu_custom_call.1} parent=11 // pred_check
          %p212 = pneg %p66
        $region14: #{tpu_custom_call.1} parent=11 // pred_check_branch
          %214 = sbr.rel (%p212) target = $region16
        $region15: #{tpu_custom_call.1} parent=11 // pred_region
          _
        $region16: #{tpu_custom_call.1} parent=11 // pred_fallthru
          _
        // Predicated region
        $region17: #{tpu_custom_call.1} parent=11 // pred_check
          %p215 = pneg %p87
        $region18: #{tpu_custom_call.1} parent=11 // pred_check_branch
          %217 = sbr.rel (%p215) target = $region20
        $region19: #{tpu_custom_call.1} parent=11 // pred_region
          _
        $region20: #{tpu_custom_call.1} parent=11 // pred_fallthru
          _
        // Predicated region
        $region21: #{tpu_custom_call.1} parent=11 // pred_check
          %p218 = pneg %p108
        $region22: #{tpu_custom_call.1} parent=11 // pred_check_branch
          %220 = sbr.rel (%p218) target = $region24
        $region23: #{tpu_custom_call.1} parent=11 // pred_region
          _
        $region24: #{tpu_custom_call.1} parent=11 // pred_fallthru
          _
        // Predicated region
        $region25: #{tpu_custom_call.1} parent=11 // pred_check
          %p221 = pneg %p129
        $region26: #{tpu_custom_call.1} parent=11 // pred_check_branch
          %223 = sbr.rel (%p221) target = $region28
        $region27: #{tpu_custom_call.1} parent=11 // pred_region
          _
        $region28: #{tpu_custom_call.1} parent=11 // pred_fallthru
          _
        // Predicated region
        $region29: #{tpu_custom_call.1} parent=11 // pred_check
          %p224 = pneg %p150
        $region30: #{tpu_custom_call.1} parent=11 // pred_check_branch
          %226 = sbr.rel (%p224) target = $region32
        $region31: #{tpu_custom_call.1} parent=11 // pred_region
          _
        $region32: #{tpu_custom_call.1} parent=11 // pred_fallthru
          _
        // Predicated region
        $region33: #{tpu_custom_call.1} parent=11 // pred_check
          %p227 = pneg %p171
        $region34: #{tpu_custom_call.1} parent=11 // pred_check_branch
          %229 = sbr.rel (%p227) target = $region36
        $region35: #{tpu_custom_call.1} parent=11 // pred_region
          _
        $region36: #{tpu_custom_call.1} parent=11 // pred_fallthru
          _
      $region12: #{tpu_custom_call.1} parent=5 // pred_fallthru
        _
      %p230 = scmp.lt.s32.totalorder %s19, 2
      // Predicated region
      $region37: #{tpu_custom_call.1} parent=5 // pred_check
        %p231 = pneg %p230
      $region38: #{tpu_custom_call.1} parent=5 // pred_check_branch
        %233 = sbr.rel (%p231) target = $region40
      $region39: #{tpu_custom_call.1} parent=5 // pred_region
        // Predicated region
        $region41: #{tpu_custom_call.1} parent=39 // pred_check
          %p234 = pneg %p39
        $region42: #{tpu_custom_call.1} parent=39 // pred_check_branch
          %236 = sbr.rel (%p234) target = $region44
        $region43: #{tpu_custom_call.1} parent=39 // pred_region
          %s237 = sand.u32 %s29, 1
          %s238 = scalar_lea.sflag [#allocation3], %s237
          %s239 = sand.u32 %s29, 1
          %s240 = smul.addr %s239, 8
          %s241 = scalar_lea.vmem [#allocation2], %s240
          %s243 = ssub.s32 128, 128
          %244 = vsyncadd %s238, %s243
          %s245 = smul.addr %s19, 128
          %s246 = scalar_lea.hbm %s0, %s245
          %s248 = sshll.u32 %s241, 4
          %s249 = int_to_ptr.vmem [resolvable:$true] %s248
          %251 = dma.hbm_to_vmem [thread:$0]  %s246, 128, %s249, %s238
        $region44: #{tpu_custom_call.1} parent=39 // pred_fallthru
          _
      $region40: #{tpu_custom_call.1} parent=5 // pred_fallthru
        _
      %p252 = scmp.le.s32.totalorder 1, %s19
      %p253 = scmp.lt.s32.totalorder %s19, 3
      %p254 = pnand %p252, %p253
      %p255 = pneg %p254
      // Predicated region
      $region45: #{tpu_custom_call.1} parent=5 // pred_check
        _
      $region46: #{tpu_custom_call.1} parent=5 // pred_check_branch
        %257 = sbr.rel (%p254) target = $region48
      $region47: #{tpu_custom_call.1} parent=5 // pred_region
        %s258 = ssub.s32 %s19, 1
        %s259 = sand.u32 %s32, 1
        %s260 = scalar_lea.sflag [#allocation3], %s259
        %s261 = sand.u32 %s32, 1
        %s262 = smul.addr %s261, 8
        %s263 = scalar_lea.vmem [#allocation2], %s262
        // Predicated region
        $region49: #{tpu_custom_call.1} parent=47 // pred_check
          %p264 = pneg %p45
        $region50: #{tpu_custom_call.1} parent=47 // pred_check_branch
          %266 = sbr.rel (%p264) target = $region52
        $region51: #{tpu_custom_call.1} parent=47 // pred_region
          %267 = dma.done %s260, 128
        $region52: #{tpu_custom_call.1} parent=47 // pred_fallthru
          _
        %s268 = sand.u32 %s32, 1
        %s269 = scalar_lea.sflag [#allocation3], %s268
        %s270 = sand.u32 %s32, 1
        %s271 = smul.addr %s270, 8
        %s272 = scalar_lea.vmem [#allocation2], %s271
        %p273 = pneg %p45
        %p274 = pneg %p42
        %p275 = pneg %p66
        %p276 = pneg %p63
        %p277 = pneg %p87
        %p278 = pneg %p84
        %p279 = pneg %p108
        %p280 = pneg %p105
        %p281 = pneg %p129
        %p282 = pneg %p126
        %p283 = pneg %p150
        %p284 = pneg %p147
        %p285 = pneg %p171
        %p286 = pneg %p168
        %p287 = pneg %p197
        %p288 = pneg %p194
        %s289 = sand.u32 %s184, 1
        %s290 = scalar_lea.sflag [#allocation4], %s289
        %s291 = sand.u32 %s184, 1
        %s292 = smul.addr %s291, 8
        %s293 = scalar_lea.vmem [#allocation5], %s292
        %v294 = vld [vmem:[%s263] sm:$0xff]
        %v295 = vld [vmem:[%s1] sm:$0xff]
        %v296 = vld [vmem:[%s1 + $0x8] sm:$0xff]
        %v297 = vld [vmem:[%s1 + $0x10] sm:$0xff]
        %v298 = vld [vmem:[%s1 + $0x18] sm:$0xff]
        %v299 = vld [vmem:[%s2] sm:$0x1]
        %v301 = vlaneseq
        %v302 = vshrl.u32 %v301, 7
        %v303 = vsub.s32 0, %v302
        %v304 = vrot.slane %v299, %v303
        %vm306 = vcmask 261120
        %v308 = vsel %vm306, %v294, 0
        %310 = vmatprep.subr.mxu0 0.0
        %311 = vmatpush1.msra.mxu0 %v295
        %312 = vmatprep.subr.mxu0 0.0
        %313 = vmatpush1.msra.mxu0 %v296
        %314 = vmatprep.subr.mxu0 0.0
        %315 = vmatpush1.msra.mxu0 %v297
        %316 = vmatprep.subr.mxu0 0.0
        %317 = vmatpush1.msra.mxu0 %v298
        %318 = vmatprep.subr.mxu0 0.0
        %319 = vmatpush1.msra.mxu0 0.0
        %320 = vmatprep.subr.mxu0 0.0
        %321 = vmatpush1.msra.mxu0 0.0
        %322 = vmatprep.subr.mxu0 0.0
        %323 = vmatpush1.msra.mxu0 0.0
        %324 = vmatprep.subr.mxu0 0.0
        %325 = vmatpush1.msra.mxu0 0.0
        %326 = vmatprep.subr.mxu0 0.0
        %327 = vmatpush1.msra.mxu0 0.0
        %328 = vmatprep.subr.mxu0 0.0
        %329 = vmatpush1.msra.mxu0 0.0
        %330 = vmatprep.subr.mxu0 0.0
        %331 = vmatpush1.msra.mxu0 0.0
        %332 = vmatprep.subr.mxu0 0.0
        %333 = vmatpush1.msra.mxu0 0.0
        %334 = vmatprep.subr.mxu0 0.0
        %335 = vmatpush1.msra.mxu0 0.0
        %336 = vmatprep.subr.mxu0 0.0
        %337 = vmatpush1.msra.mxu0 0.0
        %338 = vmatprep.subr.mxu0 0.0
        %339 = vmatpush1.msra.mxu0 0.0
        %340 = vmatprep.subr.mxu0 0.0
        %341 = vmatpush1.msra.mxu0 0.0
        %342 = vmatprep.subr.mxu0 0.0
        %343 = vmatpush1.msra.mxu0 0.0
        %344 = vmatprep.subr.mxu0 0.0
        %345 = vmatpush1.msra.mxu0 0.0
        %346 = vmatprep.subr.mxu0 0.0
        %347 = vmatpush1.msra.mxu0 0.0
        %348 = vmatprep.subr.mxu0 0.0
        %349 = vmatpush1.msra.mxu0 0.0
        %350 = vmatprep.subr.mxu0 0.0
        %351 = vmatpush1.msra.mxu0 0.0
        %352 = vmatprep.subr.mxu0 0.0
        %353 = vmatpush1.msra.mxu0 0.0
        %354 = vmatprep.subr.mxu0 0.0
        %355 = vmatpush1.msra.mxu0 0.0
        %356 = vmatprep.subr.mxu0 0.0
        %357 = vmatpush1.msra.mxu0 0.0
        %358 = vmatprep.subr.mxu0 0.0
        %359 = vmatpush1.msra.mxu0 0.0
        %360 = vmatprep.subr.mxu0 0.0
        %361 = vmatpush1.msra.mxu0 0.0
        %362 = vmatprep.subr.mxu0 0.0
        %363 = vmatpush1.msra.mxu0 0.0
        %364 = vmatprep.subr.mxu0 0.0
        %365 = vmatpush1.msra.mxu0 0.0
        %366 = vmatprep.subr.mxu0 0.0
        %367 = vmatpush1.msra.mxu0 0.0
        %368 = vmatprep.subr.mxu0 0.0
        %369 = vmatpush1.msra.mxu0 0.0
        %370 = vmatprep.subr.mxu0 0.0
        %371 = vmatpush1.msra.mxu0 0.0
        %372 = vmatprep.subr.mxu0 0.0
        %373 = vmatpush1.msra.mxu0 0.0
        %374 = vmatprep.mubr.f32.mxu0 0.0
        %375 = vmatmul.mubr.f32.gmra.mrb[0].mxu0 %v308
        %v376 = vpop.f32.mrb[0].mxu0
        %v377 = vadd.f32 %v304, %v376
        %v378 = vpop.f32.mrb[0].mxu0
        %379 = vdwg.mxu0
        %v380 = vmax.f32 %v377, 0.0
        %v381 = vld [vmem:[%s3] sm:$0xff]
        %v382 = vld [vmem:[%s3 + $0x8] sm:$0xff]
        %v383 = vld [vmem:[%s3 + $0x10] sm:$0xff]
        %v384 = vld [vmem:[%s3 + $0x18] sm:$0xff]
        %v385 = vld [vmem:[%s3 + $0x20] sm:$0xff]
        %v386 = vld [vmem:[%s3 + $0x28] sm:$0xff]
        %v387 = vld [vmem:[%s3 + $0x30] sm:$0xff]
        %v388 = vld [vmem:[%s3 + $0x38] sm:$0xff]
        %v389 = vld [vmem:[%s4] sm:$0x1]
        %v391 = vlaneseq
        %v392 = vshrl.u32 %v391, 7
        %v393 = vsub.s32 0, %v392
        %v394 = vrot.slane %v389, %v393
        %vm396 = vcmask 523264
        %v398 = vsel %vm396, %v380, 0
        %400 = vmatprep.subr.mxu0 0.0
        %401 = vmatpush1.msra.mxu0 %v381
        %402 = vmatprep.subr.mxu0 0.0
        %403 = vmatpush1.msra.mxu0 %v382
        %404 = vmatprep.subr.mxu0 0.0
        %405 = vmatpush1.msra.mxu0 %v383
        %406 = vmatprep.subr.mxu0 0.0
        %407 = vmatpush1.msra.mxu0 %v384
        %408 = vmatprep.subr.mxu0 0.0
        %409 = vmatpush1.msra.mxu0 %v385
        %410 = vmatprep.subr.mxu0 0.0
        %411 = vmatpush1.msra.mxu0 %v386
        %412 = vmatprep.subr.mxu0 0.0
        %413 = vmatpush1.msra.mxu0 %v387
        %414 = vmatprep.subr.mxu0 0.0
        %415 = vmatpush1.msra.mxu0 %v388
        %416 = vmatprep.subr.mxu0 0.0
        %417 = vmatpush1.msra.mxu0 0.0
        %418 = vmatprep.subr.mxu0 0.0
        %419 = vmatpush1.msra.mxu0 0.0
        %420 = vmatprep.subr.mxu0 0.0
        %421 = vmatpush1.msra.mxu0 0.0
        %422 = vmatprep.subr.mxu0 0.0
        %423 = vmatpush1.msra.mxu0 0.0
        %424 = vmatprep.subr.mxu0 0.0
        %425 = vmatpush1.msra.mxu0 0.0
        %426 = vmatprep.subr.mxu0 0.0
        %427 = vmatpush1.msra.mxu0 0.0
        %428 = vmatprep.subr.mxu0 0.0
        %429 = vmatpush1.msra.mxu0 0.0
        %430 = vmatprep.subr.mxu0 0.0
        %431 = vmatpush1.msra.mxu0 0.0
        %432 = vmatprep.subr.mxu0 0.0
        %433 = vmatpush1.msra.mxu0 0.0
        %434 = vmatprep.subr.mxu0 0.0
        %435 = vmatpush1.msra.mxu0 0.0
        %436 = vmatprep.subr.mxu0 0.0
        %437 = vmatpush1.msra.mxu0 0.0
        %438 = vmatprep.subr.mxu0 0.0
        %439 = vmatpush1.msra.mxu0 0.0
        %440 = vmatprep.subr.mxu0 0.0
        %441 = vmatpush1.msra.mxu0 0.0
        %442 = vmatprep.subr.mxu0 0.0
        %443 = vmatpush1.msra.mxu0 0.0
        %444 = vmatprep.subr.mxu0 0.0
        %445 = vmatpush1.msra.mxu0 0.0
        %446 = vmatprep.subr.mxu0 0.0
        %447 = vmatpush1.msra.mxu0 0.0
        %448 = vmatprep.subr.mxu0 0.0
        %449 = vmatpush1.msra.mxu0 0.0
        %450 = vmatprep.subr.mxu0 0.0
        %451 = vmatpush1.msra.mxu0 0.0
        %452 = vmatprep.subr.mxu0 0.0
        %453 = vmatpush1.msra.mxu0 0.0
        %454 = vmatprep.subr.mxu0 0.0
        %455 = vmatpush1.msra.mxu0 0.0
        %456 = vmatprep.subr.mxu0 0.0
        %457 = vmatpush1.msra.mxu0 0.0
        %458 = vmatprep.subr.mxu0 0.0
        %459 = vmatpush1.msra.mxu0 0.0
        %460 = vmatprep.subr.mxu0 0.0
        %461 = vmatpush1.msra.mxu0 0.0
        %462 = vmatprep.subr.mxu0 0.0
        %463 = vmatpush1.msra.mxu0 0.0
        %464 = vmatprep.mubr.f32.mxu0 0.0
        %465 = vmatmul.mubr.f32.gmra.mrb[0].mxu0 %v398
        %v466 = vpop.f32.mrb[0].mxu0
        %v467 = vadd.f32 %v394, %v466
        %v468 = vpop.f32.mrb[0].mxu0
        %469 = vdwg.mxu0
        %v470 = vmax.f32 %v467, 0.0
        %v471 = vld [vmem:[%s5] sm:$0xff]
        %v472 = vld [vmem:[%s5 + $0x8] sm:$0xff]
        %v473 = vld [vmem:[%s5 + $0x10] sm:$0xff]
        %v474 = vld [vmem:[%s5 + $0x18] sm:$0xff]
        %v475 = vld [vmem:[%s5 + $0x20] sm:$0xff]
        %v476 = vld [vmem:[%s5 + $0x28] sm:$0xff]
        %v477 = vld [vmem:[%s5 + $0x30] sm:$0xff]
        %v478 = vld [vmem:[%s5 + $0x38] sm:$0xff]
        %v479 = vld [vmem:[%s6] sm:$0x1]
        %v481 = vlaneseq
        %v482 = vshrl.u32 %v481, 7
        %v483 = vsub.s32 0, %v482
        %v484 = vrot.slane %v479, %v483
        %v487 = vsel %vm396, %v470, 0
        %489 = vmatprep.subr.mxu0 0.0
        %490 = vmatpush1.msra.mxu0 %v471
        %491 = vmatprep.subr.mxu0 0.0
        %492 = vmatpush1.msra.mxu0 %v472
        %493 = vmatprep.subr.mxu0 0.0
        %494 = vmatpush1.msra.mxu0 %v473
        %495 = vmatprep.subr.mxu0 0.0
        %496 = vmatpush1.msra.mxu0 %v474
        %497 = vmatprep.subr.mxu0 0.0
        %498 = vmatpush1.msra.mxu0 %v475
        %499 = vmatprep.subr.mxu0 0.0
        %500 = vmatpush1.msra.mxu0 %v476
        %501 = vmatprep.subr.mxu0 0.0
        %502 = vmatpush1.msra.mxu0 %v477
        %503 = vmatprep.subr.mxu0 0.0
        %504 = vmatpush1.msra.mxu0 %v478
        %505 = vmatprep.subr.mxu0 0.0
        %506 = vmatpush1.msra.mxu0 0.0
        %507 = vmatprep.subr.mxu0 0.0
        %508 = vmatpush1.msra.mxu0 0.0
        %509 = vmatprep.subr.mxu0 0.0
        %510 = vmatpush1.msra.mxu0 0.0
        %511 = vmatprep.subr.mxu0 0.0
        %512 = vmatpush1.msra.mxu0 0.0
        %513 = vmatprep.subr.mxu0 0.0
        %514 = vmatpush1.msra.mxu0 0.0
        %515 = vmatprep.subr.mxu0 0.0
        %516 = vmatpush1.msra.mxu0 0.0
        %517 = vmatprep.subr.mxu0 0.0
        %518 = vmatpush1.msra.mxu0 0.0
        %519 = vmatprep.subr.mxu0 0.0
        %520 = vmatpush1.msra.mxu0 0.0
        %521 = vmatprep.subr.mxu0 0.0
        %522 = vmatpush1.msra.mxu0 0.0
        %523 = vmatprep.subr.mxu0 0.0
        %524 = vmatpush1.msra.mxu0 0.0
        %525 = vmatprep.subr.mxu0 0.0
        %526 = vmatpush1.msra.mxu0 0.0
        %527 = vmatprep.subr.mxu0 0.0
        %528 = vmatpush1.msra.mxu0 0.0
        %529 = vmatprep.subr.mxu0 0.0
        %530 = vmatpush1.msra.mxu0 0.0
        %531 = vmatprep.subr.mxu0 0.0
        %532 = vmatpush1.msra.mxu0 0.0
        %533 = vmatprep.subr.mxu0 0.0
        %534 = vmatpush1.msra.mxu0 0.0
        %535 = vmatprep.subr.mxu0 0.0
        %536 = vmatpush1.msra.mxu0 0.0
        %537 = vmatprep.subr.mxu0 0.0
        %538 = vmatpush1.msra.mxu0 0.0
        %539 = vmatprep.subr.mxu0 0.0
        %540 = vmatpush1.msra.mxu0 0.0
        %541 = vmatprep.subr.mxu0 0.0
        %542 = vmatpush1.msra.mxu0 0.0
        %543 = vmatprep.subr.mxu0 0.0
        %544 = vmatpush1.msra.mxu0 0.0
        %545 = vmatprep.subr.mxu0 0.0
        %546 = vmatpush1.msra.mxu0 0.0
        %547 = vmatprep.subr.mxu0 0.0
        %548 = vmatpush1.msra.mxu0 0.0
        %549 = vmatprep.subr.mxu0 0.0
        %550 = vmatpush1.msra.mxu0 0.0
        %551 = vmatprep.subr.mxu0 0.0
        %552 = vmatpush1.msra.mxu0 0.0
        %553 = vmatprep.mubr.f32.mxu0 0.0
        %554 = vmatmul.mubr.f32.gmra.mrb[0].mxu0 %v487
        %v555 = vpop.f32.mrb[0].mxu0
        %v556 = vadd.f32 %v484, %v555
        %v557 = vpop.f32.mrb[0].mxu0
        %558 = vdwg.mxu0
        %559 = vst.msk [vmem:[%s293] sm:$0xff] %vm306, %v556
        %s560 = sand.u32 %s184, 1
        %s561 = scalar_lea.sflag [#allocation4], %s560
        %s562 = sand.u32 %s184, 1
        %s563 = smul.addr %s562, 8
        %s564 = scalar_lea.vmem [#allocation5], %s563
        // Predicated region
        $region53: #{tpu_custom_call.1} parent=47 // pred_check
          %p565 = pneg %p194
        $region54: #{tpu_custom_call.1} parent=47 // pred_check_branch
          %567 = sbr.rel (%p565) target = $region56
        $region55: #{tpu_custom_call.1} parent=47 // pred_region
          %s569 = ssub.s32 128, 128
          %570 = vsyncadd %s561, %s569
          %s571 = smul.addr %s24, 128
          %s572 = scalar_lea.hbm %s7, %s571
          %s574 = sshll.u32 %s564, 4
          %s575 = int_to_ptr.vmem [resolvable:$true] %s574
          %577 = dma.vmem_to_hbm [thread:$0]  %s575, 128, %s572, %s561
        $region56: #{tpu_custom_call.1} parent=47 // pred_fallthru
          _
      $region48: #{tpu_custom_call.1} parent=5 // pred_fallthru
        _
      %p578 = scmp.le.s32.totalorder 2, %s19
      // Predicated region
      $region57: #{tpu_custom_call.1} parent=5 // pred_check
        %p579 = pneg %p578
      $region58: #{tpu_custom_call.1} parent=5 // pred_check_branch
        %581 = sbr.rel (%p579) target = $region60
      $region59: #{tpu_custom_call.1} parent=5 // pred_region
        %s582 = ssub.s32 %s19, 2
        // Predicated region
        $region61: #{tpu_custom_call.1} parent=59 // pred_check
          %p583 = pneg %p200
        $region62: #{tpu_custom_call.1} parent=59 // pred_check_branch
          %585 = sbr.rel (%p583) target = $region64
        $region63: #{tpu_custom_call.1} parent=59 // pred_region
          %s586 = sand.u32 %s185, 1
          %s587 = scalar_lea.sflag [#allocation4], %s586
          %s588 = sand.u32 %s185, 1
          %s589 = smul.addr %s588, 8
          %s590 = scalar_lea.vmem [#allocation5], %s589
          %591 = dma.done %s587, 128
        $region64: #{tpu_custom_call.1} parent=59 // pred_fallthru
          _
      $region60: #{tpu_custom_call.1} parent=5 // pred_fallthru
        _
    $region6: #{tpu_custom_call.1} parent=1 // loop_footer
      %s23 = sadd.s32 1, %s19
    $region7: #{tpu_custom_call.1} parent=1 // loop_footer_branch
      %18 = sbr.rel target = $region3
    $region8: #{tpu_custom_call.1} parent=1 // loop_exit
      _
    %592 = vsyncpa [#allocation3], 1
    %s593 = scalar_lea.sflag [#allocation3], 1
    %594 = vsyncpa %s593, 1
    %595 = vsyncpa [#allocation4], 1
    %s596 = scalar_lea.sflag [#allocation4], 1
    %597 = vsyncpa %s596, 1

</llo_original>
